<compile_context>
chip_gen: v7x
topology: tpu7x:2x2x1
jax: 0.10.0
libtpu: 0.0.40
codegen_flags: <defaults>
</compile_context>

<pallas_src>
import math
from functools import partial

import jax
import jax.numpy as jnp
from jax import lax
from jax.experimental import pallas as pl
from jax.experimental.pallas import tpu as pltpu

_VMEM_LIMIT = 48 * 1024 * 1024  # explicit scoped-VMEM budget: > v5e/v6e defaults,
                                # comfortable headroom under v7x's 64 MiB physical.


def _round_up(n, m):
    return ((n + m - 1) // m) * m


def _pick_tile(n, prefs=(512, 256)):
    """Row/seq tile: largest 256-multiple that divides n; large awkward extents
    fall back to 256 (caller pads); small extents stay full."""
    for p in prefs:
        if n >= p and n % p == 0:
            return p
    if n > prefs[-1]:
        return prefs[-1]
    return n


def _pick_div_tile(n, prefs=(512, 256)):
    """Feature-dim tile: only tile when it divides exactly (no padding of D)."""
    for p in prefs:
        if n >= p and n % p == 0:
            return p
    return n


# --------------------------------------------------------------------------- #
# Kernel 1: fused Q/K/V projection, tiled over (rows, N, K)
# --------------------------------------------------------------------------- #
def _qkv_proj_kernel(q_ref, k_ref, v_ref,
                     wq_ref, wk_ref, wv_ref,
                     bq_ref, bk_ref, bv_ref,
                     qp_ref, kp_ref, vp_ref,
                     qacc, kacc, vacc):
    """y = x @ W_t + b for the three projections.  Weights pre-transposed and
    bf16; 1/sqrt(d_k) already folded into wq/bq; f32 accumulation in scratch."""
    ki = pl.program_id(2)

    @pl.when(ki == 0)
    def _():
        qacc[...] = jnp.zeros_like(qacc)
        kacc[...] = jnp.zeros_like(kacc)
        vacc[...] = jnp.zeros_like(vacc)

    qacc[...] += jnp.dot(q_ref[...], wq_ref[...], preferred_element_type=jnp.float32)
    kacc[...] += jnp.dot(k_ref[...], wk_ref[...], preferred_element_type=jnp.float32)
    vacc[...] += jnp.dot(v_ref[...], wv_ref[...], preferred_element_type=jnp.float32)

    @pl.when(ki == pl.num_programs(2) - 1)
    def _():
        qp_ref[...] = (qacc[...] + bq_ref[...]).astype(qp_ref.dtype)
        kp_ref[...] = (kacc[...] + bk_ref[...]).astype(kp_ref.dtype)
        vp_ref[...] = (vacc[...] + bv_ref[...]).astype(vp_ref.dtype)


# --------------------------------------------------------------------------- #
# Kernel 2: per-(batch, q-tile) attention over all heads with a KV grid axis
#           (flash-style online softmax) + fused output projection
# --------------------------------------------------------------------------- #
def _attn_out_kernel_masked(qp_ref, kp_ref, vp_ref, m_ref, wo_ref, bo_ref, o_ref,
                            acc_sc, m_sc, l_sc, *, heads, d_k):
    kv = pl.program_id(2)

    @pl.when(kv == 0)
    def _():
        acc_sc[...] = jnp.zeros_like(acc_sc)
        m_sc[...] = jnp.full_like(m_sc, -jnp.inf)
        l_sc[...] = jnp.zeros_like(l_sc)

    qp = qp_ref[0]           # (tq,  D) bf16, already scaled by 1/sqrt(d_k)
    kp = kp_ref[0]           # (tkv, D) bf16
    vp = vp_ref[0]           # (tkv, D) bf16

    # Mask bias computed ONCE per (b, q-tile, kv-tile) block, reused by all heads
    # (matches torch masked_fill(mask == 0, -1e9)).
    bias = jnp.where(m_ref[0] == 0, jnp.float32(-1.0e9), jnp.float32(0.0))  # (tq, tkv)

    # Static unroll over heads; running state lives in VMEM scratch so per-head
    # temporaries do not stay live across the whole body.
    # TODO(synk): for very small d_k / many heads, emit a head-major layout from
    # kernel 1 and move heads onto a grid axis so BlockSpec DMA delivers per-head
    # tiles (avoids sub-128 lane-axis slicing inside the kernel).
    for h in range(heads):
        sl = slice(h * d_k, (h + 1) * d_k)
        s = lax.dot_general(qp[:, sl], kp[:, sl], (((1,), (1,)), ((), ())),
                            preferred_element_type=jnp.float32) + bias      # (tq, tkv)
        m_prev = m_sc[h]                                                     # (tq, 1)
        m_new = jnp.maximum(m_prev, jnp.max(s, axis=-1, keepdims=True))
        alpha = jnp.exp(m_prev - m_new)
        p = jnp.exp(s - m_new)
        l_sc[h] = alpha * l_sc[h] + jnp.sum(p, axis=-1, keepdims=True)
        acc_sc[:, sl] = alpha * acc_sc[:, sl] + jnp.dot(
            p.astype(vp.dtype), vp[:, sl], preferred_element_type=jnp.float32)
        m_sc[h] = m_new

    @pl.when(kv == pl.num_programs(2) - 1)
    def _():
        # Normalize each head's context (d_k-wide, after the PV matmul, EUP recip),
        # then ONE full-width D-contraction output projection (no HBM round trip).
        for h in range(heads):
            sl = slice(h * d_k, (h + 1) * d_k)
            acc_sc[:, sl] = acc_sc[:, sl] * pl.reciprocal(l_sc[h], approx=True)
        ctx = acc_sc[...].astype(jnp.bfloat16)                               # (tq, D)
        o_ref[0] = (jnp.dot(ctx, wo_ref[...], preferred_element_type=jnp.float32)
                    + bo_ref[...]).astype(o_ref.dtype)


def _attn_out_kernel_nomask(qp_ref, kp_ref, vp_ref, wo_ref, bo_ref, o_ref,
                            acc_sc, *, heads, d_k):
    kv = pl.program_id(2)

    @pl.when(kv == 0)
    def _():
        acc_sc[...] = jnp.zeros_like(acc_sc)

    qp = qp_ref[0]
    kp = kp_ref[0]
    vp = vp_ref[0]

    # Matches the torch module exactly: with mask=None there is NO softmax; the
    # raw scaled scores are multiplied with V (so kv-tiles accumulate linearly).
    for h in range(heads):
        sl = slice(h * d_k, (h + 1) * d_k)
        s = lax.dot_general(qp[:, sl], kp[:, sl], (((1,), (1,)), ((), ())),
                            preferred_element_type=jnp.float32)
        acc_sc[:, sl] = acc_sc[:, sl] + jnp.dot(
            s.astype(vp.dtype), vp[:, sl], preferred_element_type=jnp.float32)

    @pl.when(kv == pl.num_programs(2) - 1)
    def _():
        ctx = acc_sc[...].astype(jnp.bfloat16)
        o_ref[0] = (jnp.dot(ctx, wo_ref[...], preferred_element_type=jnp.float32)
                    + bo_ref[...]).astype(o_ref.dtype)


# --------------------------------------------------------------------------- #
# Wrapper
# --------------------------------------------------------------------------- #
def multi_head_attention(q, k, v, params, heads, mask=None):
    bs, S, D = q.shape
    d_k = D // heads
    scale = 1.0 / math.sqrt(d_k)
    rows = bs * S

    # Host-side prep: pre-transpose weights (kernels compute x @ W_t; no in-kernel
    # transposes), fold the attention scale into the Q projection, cast all matmul
    # operands to bf16 (f32 accumulation inside the kernels).
    wq_t = (params["wq"] * scale).T.astype(jnp.bfloat16)
    wk_t = params["wk"].T.astype(jnp.bfloat16)
    wv_t = params["wv"].T.astype(jnp.bfloat16)
    wo_t = params["wo"].T.astype(jnp.bfloat16)
    bq = (params["bq"] * scale).reshape(1, D).astype(jnp.float32)
    bk = params["bk"].reshape(1, D).astype(jnp.float32)
    bv = params["bv"].reshape(1, D).astype(jnp.float32)
    bo = params["bo"].reshape(1, D).astype(jnp.float32)

    q2 = q.reshape(rows, D).astype(jnp.bfloat16)
    k2 = k.reshape(rows, D).astype(jnp.bfloat16)
    v2 = v.reshape(rows, D).astype(jnp.bfloat16)

    # ---- Kernel 1: fused QKV projection, grid = (row tiles, N tiles, K tiles) --
    tm = _pick_tile(rows)
    tn = _pick_div_tile(D)
    tk = _pick_div_tile(D)
    rows_p = _round_up(rows, tm)
    if rows_p != rows:
        pad = ((0, rows_p - rows), (0, 0))
        q2 = jnp.pad(q2, pad)
        k2 = jnp.pad(k2, pad)
        v2 = jnp.pad(v2, pad)

    x_spec = pl.BlockSpec((tm, tk), lambda i, j, ki: (i, ki))
    w_spec = pl.BlockSpec((tk, tn), lambda i, j, ki: (ki, j))
    b_spec = pl.BlockSpec((1, tn), lambda i, j, ki: (0, j))
    y_spec = pl.BlockSpec((tm, tn), lambda i, j, ki: (i, j))

    qp, kp, vp = pl.pallas_call(
        _qkv_proj_kernel,
        out_shape=[jax.ShapeDtypeStruct((rows_p, D), jnp.bfloat16) for _ in range(3)],
        grid=(rows_p // tm, D // tn, D // tk),
        in_specs=[x_spec, x_spec, x_spec,
                  w_spec, w_spec, w_spec,
                  b_spec, b_spec, b_spec],
        out_specs=[y_spec, y_spec, y_spec],
        scratch_shapes=[pltpu.VMEM((tm, tn), jnp.float32) for _ in range(3)],
        compiler_params=pltpu.CompilerParams(
            dimension_semantics=("parallel", "parallel", "arbitrary"),
            vmem_limit_bytes=_VMEM_LIMIT),
    )(q2, k2, v2, wq_t, wk_t, wv_t, bq, bk, bv)

    qp = qp[:rows].reshape(bs, S, D)
    kp = kp[:rows].reshape(bs, S, D)
    vp = vp[:rows].reshape(bs, S, D)

    # ---- Kernel 2: flash attention over a KV grid axis + fused output proj -----
    use_mask = mask is not None
    t = _pick_tile(S)                      # q-row tile == kv tile
    Sp = _round_up(S, t)
    if Sp != S:
        pad3 = ((0, 0), (0, Sp - S), (0, 0))
        qp = jnp.pad(qp, pad3)
        kp = jnp.pad(kp, pad3)             # zero K/V padding contributes nothing
        vp = jnp.pad(vp, pad3)

    q_spec = pl.BlockSpec((1, t, D), lambda b, qi, kv: (b, qi, 0))
    kv_spec = pl.BlockSpec((1, t, D), lambda b, qi, kv: (b, kv, 0))
    wo_spec = pl.BlockSpec((D, D), lambda b, qi, kv: (0, 0))
    bo_spec = pl.BlockSpec((1, D), lambda b, qi, kv: (0, 0))
    out_spec = pl.BlockSpec((1, t, D), lambda b, qi, kv: (b, qi, 0))
    # TODO(synk): for D large enough that a bf16 (D, D) wo block strains v7x VMEM,
    # tile the output-projection N dimension with an additional grid axis.

    in_specs = [q_spec, kv_spec, kv_spec]
    args = [qp, kp, vp]
    scratch = [pltpu.VMEM((t, D), jnp.float32)]            # head-concat context acc
    if use_mask:
        m8 = (mask != 0).astype(jnp.int8)                  # int8 stream (4x < int32)
        if Sp != S:
            m8 = jnp.pad(m8, ((0, 0), (0, Sp - S), (0, Sp - S)))  # pad => masked
        in_specs.append(pl.BlockSpec((1, t, t), lambda b, qi, kv: (b, qi, kv)))
        args.append(m8)
        scratch += [pltpu.VMEM((heads, t, 1), jnp.float32),    # running max per head
                    pltpu.VMEM((heads, t, 1), jnp.float32)]    # running sum per head
        kern = partial(_attn_out_kernel_masked, heads=heads, d_k=d_k)
    else:
        kern = partial(_attn_out_kernel_nomask, heads=heads, d_k=d_k)
    in_specs += [wo_spec, bo_spec]
    args += [wo_t, bo]

    out = pl.pallas_call(
        kern,
        out_shape=jax.ShapeDtypeStruct((bs, Sp, D), jnp.float32),
        grid=(bs, Sp // t, Sp // t),
        in_specs=in_specs,
        out_specs=out_spec,
        scratch_shapes=scratch,
        compiler_params=pltpu.CompilerParams(
            dimension_semantics=("parallel", "parallel", "arbitrary"),
            vmem_limit_bytes=_VMEM_LIMIT),
    )(*args)
    return out[:, :S, :]


# --------------------------------------------------------------------------- #
# Pure-jnp reference (PyTorch forward, eval mode: dropout = identity)
# --------------------------------------------------------------------------- #
def _reference(q, k, v, params, heads, mask=None):
    bs, S, D = q.shape
    d_k = D // heads
    qp = (q @ params["wq"].T + params["bq"]).reshape(bs, S, heads, d_k).transpose(0, 2, 1, 3)
    kp = (k @ params["wk"].T + params["bk"]).reshape(bs, S, heads, d_k).transpose(0, 2, 1, 3)
    vp = (v @ params["wv"].T + params["bv"]).reshape(bs, S, heads, d_k).transpose(0, 2, 1, 3)
    scores = jnp.einsum("bhqd,bhkd->bhqk", qp, kp) / math.sqrt(d_k)
    if mask is not None:
        scores = jnp.where(mask[:, None, :, :] == 0, -1.0e9, scores)
        scores = jax.nn.softmax(scores, axis=-1)
    o = jnp.einsum("bhqk,bhkd->bhqd", scores, vp)
    concat = o.transpose(0, 2, 1, 3).reshape(bs, S, D)
    return concat @ params["wo"].T + params["bo"]


if __name__ == "__main__":
    heads = 4
    d_model = 32
    bs = 2
    seq = 8

    key = jax.random.PRNGKey(0)
    ks = jax.random.split(key, 12)
    bound = 1.0 / math.sqrt(d_model)
    u = lambda kk, shape: jax.random.uniform(kk, shape, jnp.float32, -bound, bound)

    params = {
        "wq": u(ks[0], (d_model, d_model)), "bq": u(ks[1], (d_model,)),
        "wk": u(ks[2], (d_model, d_model)), "bk": u(ks[3], (d_model,)),
        "wv": u(ks[4], (d_model, d_model)), "bv": u(ks[5], (d_model,)),
        "wo": u(ks[6], (d_model, d_model)), "bo": u(ks[7], (d_model,)),
    }

    q = jax.random.normal(ks[8], (bs, seq, d_model), jnp.float32)
    k = jax.random.normal(ks[9], (bs, seq, d_model), jnp.float32)
    v = jax.random.normal(ks[10], (bs, seq, d_model), jnp.float32)
    # causal mask (bs, seq, seq); the torch code unsqueezes over the head dim
    mask = jnp.broadcast_to(jnp.tril(jnp.ones((seq, seq), jnp.int32)), (bs, seq, seq))

    # masked path (softmax)
    out = jax.block_until_ready(multi_head_attention(q, k, v, params, heads, mask=mask))
    ref = _reference(q, k, v, params, heads, mask=mask)
    assert out.shape == (bs, seq, d_model)
    # bf16 matmul operands + approx reciprocal => relaxed tolerance vs f32 reference
    err = float(jnp.max(jnp.abs(out - ref)))
    assert jnp.allclose(out, ref, atol=5e-2, rtol=5e-2), err

    # mask=None path (no softmax and no mask operand at all, matching the module)
    out_nm = jax.block_until_ready(multi_head_attention(q, k, v, params, heads, mask=None))
    ref_nm = _reference(q, k, v, params, heads, mask=None)
    err_nm = float(jnp.max(jnp.abs(out_nm - ref_nm)))
    assert jnp.allclose(out_nm, ref_nm, atol=5e-2, rtol=5e-2), err_nm

    print("KERNEL_OK")
</pallas_src>

<mosaic_0001>
module attributes {stable_mosaic.version = 11 : i64} {
  func.func @_qkv_proj_kernel(%arg0: i32, %arg1: i32, %arg2: i32, %arg3: memref<16x32xbf16, #tpu.memory_space<vmem>>, %arg4: memref<16x32xbf16, #tpu.memory_space<vmem>>, %arg5: memref<16x32xbf16, #tpu.memory_space<vmem>>, %arg6: memref<32x32xbf16, #tpu.memory_space<vmem>>, %arg7: memref<32x32xbf16, #tpu.memory_space<vmem>>, %arg8: memref<32x32xbf16, #tpu.memory_space<vmem>>, %arg9: memref<1x32xf32, #tpu.memory_space<vmem>>, %arg10: memref<1x32xf32, #tpu.memory_space<vmem>>, %arg11: memref<1x32xf32, #tpu.memory_space<vmem>>, %arg12: memref<16x32xbf16, #tpu.memory_space<vmem>>, %arg13: memref<16x32xbf16, #tpu.memory_space<vmem>>, %arg14: memref<16x32xbf16, #tpu.memory_space<vmem>>, %arg15: memref<16x32xf32, #tpu.memory_space<vmem>>, %arg16: memref<16x32xf32, #tpu.memory_space<vmem>>, %arg17: memref<16x32xf32, #tpu.memory_space<vmem>>) attributes {dimension_semantics = [#tpu.dimension_semantics<parallel>, #tpu.dimension_semantics<parallel>, #tpu.dimension_semantics<arbitrary>], iteration_bounds = array<i64: 1, 1, 1>, scalar_prefetch = 0 : i64, scratch_operands = 3 : i64, tpu.core_type = #tpu.core_type<tc>, window_params = [{transform_indices = @transform_0, window_bounds = array<i64: 16, 32>}, {transform_indices = @transform_1, window_bounds = array<i64: 16, 32>}, {transform_indices = @transform_2, window_bounds = array<i64: 16, 32>}, {transform_indices = @transform_3, window_bounds = array<i64: 32, 32>}, {transform_indices = @transform_4, window_bounds = array<i64: 32, 32>}, {transform_indices = @transform_5, window_bounds = array<i64: 32, 32>}, {transform_indices = @transform_6, window_bounds = array<i64: 1, 32>}, {transform_indices = @transform_7, window_bounds = array<i64: 1, 32>}, {transform_indices = @transform_8, window_bounds = array<i64: 1, 32>}, {transform_indices = @transform_9, window_bounds = array<i64: 16, 32>}, {transform_indices = @transform_10, window_bounds = array<i64: 16, 32>}, {transform_indices = @transform_11, window_bounds = array<i64: 16, 32>}]} {
    %c0_i32 = arith.constant 0 : i32
    %0 = arith.cmpi eq, %arg2, %c0_i32 : i32
    %1 = arith.extui %0 : i1 to i32
    %c0_i32_0 = arith.constant 0 : i32
    %2 = arith.cmpi ne, %1, %c0_i32_0 : i32
    scf.if %2 {
      %cst_28 = arith.constant 0.000000e+00 : f32
      %24 = vector.broadcast %cst_28 : f32 to vector<16x32xf32>
      %c0_29 = arith.constant 0 : index
      %c0_30 = arith.constant 0 : index
      %25 = vector.load %arg15[%c0_29, %c0_30] : memref<16x32xf32, #tpu.memory_space<vmem>>, vector<16x32xf32>
      tpu.vector_store %arg15[%c0_29, %c0_30], %24 {strides = array<i32>} : memref<16x32xf32, #tpu.memory_space<vmem>>, vector<16x32xf32>,
      %cst_31 = arith.constant 0.000000e+00 : f32
      %26 = vector.broadcast %cst_31 : f32 to vector<16x32xf32>
      %c0_32 = arith.constant 0 : index
      %c0_33 = arith.constant 0 : index
      %27 = vector.load %arg16[%c0_32, %c0_33] : memref<16x32xf32, #tpu.memory_space<vmem>>, vector<16x32xf32>
      tpu.vector_store %arg16[%c0_32, %c0_33], %26 {strides = array<i32>} : memref<16x32xf32, #tpu.memory_space<vmem>>, vector<16x32xf32>,
      %cst_34 = arith.constant 0.000000e+00 : f32
      %28 = vector.broadcast %cst_34 : f32 to vector<16x32xf32>
      %c0_35 = arith.constant 0 : index
      %c0_36 = arith.constant 0 : index
      %29 = vector.load %arg17[%c0_35, %c0_36] : memref<16x32xf32, #tpu.memory_space<vmem>>, vector<16x32xf32>
      tpu.vector_store %arg17[%c0_35, %c0_36], %28 {strides = array<i32>} : memref<16x32xf32, #tpu.memory_space<vmem>>, vector<16x32xf32>,
    } else {
    }
    %c0 = arith.constant 0 : index
    %c0_1 = arith.constant 0 : index
    %3 = vector.load %arg15[%c0, %c0_1] : memref<16x32xf32, #tpu.memory_space<vmem>>, vector<16x32xf32>
    %c0_2 = arith.constant 0 : index
    %c0_3 = arith.constant 0 : index
    %4 = vector.load %arg3[%c0_2, %c0_3] : memref<16x32xbf16, #tpu.memory_space<vmem>>, vector<16x32xbf16>
    %c0_4 = arith.constant 0 : index
    %c0_5 = arith.constant 0 : index
    %5 = vector.load %arg6[%c0_4, %c0_5] : memref<32x32xbf16, #tpu.memory_space<vmem>>, vector<32x32xbf16>
    %cst = arith.constant dense<0.000000e+00> : vector<16x32xf32>
    %6 = tpu.matmul %4, %5, %cst {dimension_numbers = #tpu.dot_dimension_numbers<[1], [0], [0], [1], [0, 0, 1, 1], [], []>} : vector<16x32xbf16>, vector<32x32xbf16>, vector<16x32xf32> -> vector<16x32xf32>
    %7 = arith.addf %3, %6 : vector<16x32xf32>
    %c0_6 = arith.constant 0 : index
    %c0_7 = arith.constant 0 : index
    %8 = vector.load %arg15[%c0_6, %c0_7] : memref<16x32xf32, #tpu.memory_space<vmem>>, vector<16x32xf32>
    tpu.vector_store %arg15[%c0_6, %c0_7], %7 {strides = array<i32>} : memref<16x32xf32, #tpu.memory_space<vmem>>, vector<16x32xf32>,
    %c0_8 = arith.constant 0 : index
    %c0_9 = arith.constant 0 : index
    %9 = vector.load %arg16[%c0_8, %c0_9] : memref<16x32xf32, #tpu.memory_space<vmem>>, vector<16x32xf32>
    %c0_10 = arith.constant 0 : index
    %c0_11 = arith.constant 0 : index
    %10 = vector.load %arg4[%c0_10, %c0_11] : memref<16x32xbf16, #tpu.memory_space<vmem>>, vector<16x32xbf16>
    %c0_12 = arith.constant 0 : index
    %c0_13 = arith.constant 0 : index
    %11 = vector.load %arg7[%c0_12, %c0_13] : memref<32x32xbf16, #tpu.memory_space<vmem>>, vector<32x32xbf16>
    %cst_14 = arith.constant dense<0.000000e+00> : vector<16x32xf32>
    %12 = tpu.matmul %10, %11, %cst_14 {dimension_numbers = #tpu.dot_dimension_numbers<[1], [0], [0], [1], [0, 0, 1, 1], [], []>} : vector<16x32xbf16>, vector<32x32xbf16>, vector<16x32xf32> -> vector<16x32xf32>
    %13 = arith.addf %9, %12 : vector<16x32xf32>
    %c0_15 = arith.constant 0 : index
    %c0_16 = arith.constant 0 : index
    %14 = vector.load %arg16[%c0_15, %c0_16] : memref<16x32xf32, #tpu.memory_space<vmem>>, vector<16x32xf32>
    tpu.vector_store %arg16[%c0_15, %c0_16], %13 {strides = array<i32>} : memref<16x32xf32, #tpu.memory_space<vmem>>, vector<16x32xf32>,
    %c0_17 = arith.constant 0 : index
    %c0_18 = arith.constant 0 : index
    %15 = vector.load %arg17[%c0_17, %c0_18] : memref<16x32xf32, #tpu.memory_space<vmem>>, vector<16x32xf32>
    %c0_19 = arith.constant 0 : index
    %c0_20 = arith.constant 0 : index
    %16 = vector.load %arg5[%c0_19, %c0_20] : memref<16x32xbf16, #tpu.memory_space<vmem>>, vector<16x32xbf16>
    %c0_21 = arith.constant 0 : index
    %c0_22 = arith.constant 0 : index
    %17 = vector.load %arg8[%c0_21, %c0_22] : memref<32x32xbf16, #tpu.memory_space<vmem>>, vector<32x32xbf16>
    %cst_23 = arith.constant dense<0.000000e+00> : vector<16x32xf32>
    %18 = tpu.matmul %16, %17, %cst_23 {dimension_numbers = #tpu.dot_dimension_numbers<[1], [0], [0], [1], [0, 0, 1, 1], [], []>} : vector<16x32xbf16>, vector<32x32xbf16>, vector<16x32xf32> -> vector<16x32xf32>
    %19 = arith.addf %15, %18 : vector<16x32xf32>
    %c0_24 = arith.constant 0 : index
    %c0_25 = arith.constant 0 : index
    %20 = vector.load %arg17[%c0_24, %c0_25] : memref<16x32xf32, #tpu.memory_space<vmem>>, vector<16x32xf32>
    tpu.vector_store %arg17[%c0_24, %c0_25], %19 {strides = array<i32>} : memref<16x32xf32, #tpu.memory_space<vmem>>, vector<16x32xf32>,
    %c0_i32_26 = arith.constant 0 : i32
    %21 = arith.cmpi eq, %arg2, %c0_i32_26 : i32
    %22 = arith.extui %21 : i1 to i32
    %c0_i32_27 = arith.constant 0 : i32
    %23 = arith.cmpi ne, %22, %c0_i32_27 : i32
    scf.if %23 {
      %c0_28 = arith.constant 0 : index
      %c0_29 = arith.constant 0 : index
      %24 = vector.load %arg15[%c0_28, %c0_29] : memref<16x32xf32, #tpu.memory_space<vmem>>, vector<16x32xf32>
      %c0_30 = arith.constant 0 : index
      %c0_31 = arith.constant 0 : index
      %25 = vector.load %arg9[%c0_30, %c0_31] : memref<1x32xf32, #tpu.memory_space<vmem>>, vector<1x32xf32>
      %26 = vector.broadcast %25 : vector<1x32xf32> to vector<16x32xf32>
      %27 = arith.addf %24, %26 : vector<16x32xf32>
      %28 = arith.truncf %27 : vector<16x32xf32> to vector<16x32xbf16>
      %c0_32 = arith.constant 0 : index
      %c0_33 = arith.constant 0 : index
      %29 = vector.load %arg12[%c0_32, %c0_33] : memref<16x32xbf16, #tpu.memory_space<vmem>>, vector<16x32xbf16>
      tpu.vector_store %arg12[%c0_32, %c0_33], %28 {strides = array<i32>} : memref<16x32xbf16, #tpu.memory_space<vmem>>, vector<16x32xbf16>,
      %c0_34 = arith.constant 0 : index
      %c0_35 = arith.constant 0 : index
      %30 = vector.load %arg16[%c0_34, %c0_35] : memref<16x32xf32, #tpu.memory_space<vmem>>, vector<16x32xf32>
      %c0_36 = arith.constant 0 : index
      %c0_37 = arith.constant 0 : index
      %31 = vector.load %arg10[%c0_36, %c0_37] : memref<1x32xf32, #tpu.memory_space<vmem>>, vector<1x32xf32>
      %32 = vector.broadcast %31 : vector<1x32xf32> to vector<16x32xf32>
      %33 = arith.addf %30, %32 : vector<16x32xf32>
      %34 = arith.truncf %33 : vector<16x32xf32> to vector<16x32xbf16>
      %c0_38 = arith.constant 0 : index
      %c0_39 = arith.constant 0 : index
      %35 = vector.load %arg13[%c0_38, %c0_39] : memref<16x32xbf16, #tpu.memory_space<vmem>>, vector<16x32xbf16>
      tpu.vector_store %arg13[%c0_38, %c0_39], %34 {strides = array<i32>} : memref<16x32xbf16, #tpu.memory_space<vmem>>, vector<16x32xbf16>,
      %c0_40 = arith.constant 0 : index
      %c0_41 = arith.constant 0 : index
      %36 = vector.load %arg17[%c0_40, %c0_41] : memref<16x32xf32, #tpu.memory_space<vmem>>, vector<16x32xf32>
      %c0_42 = arith.constant 0 : index
      %c0_43 = arith.constant 0 : index
      %37 = vector.load %arg11[%c0_42, %c0_43] : memref<1x32xf32, #tpu.memory_space<vmem>>, vector<1x32xf32>
      %38 = vector.broadcast %37 : vector<1x32xf32> to vector<16x32xf32>
      %39 = arith.addf %36, %38 : vector<16x32xf32>
      %40 = arith.truncf %39 : vector<16x32xf32> to vector<16x32xbf16>
      %c0_44 = arith.constant 0 : index
      %c0_45 = arith.constant 0 : index
      %41 = vector.load %arg14[%c0_44, %c0_45] : memref<16x32xbf16, #tpu.memory_space<vmem>>, vector<16x32xbf16>
      tpu.vector_store %arg14[%c0_44, %c0_45], %40 {strides = array<i32>} : memref<16x32xbf16, #tpu.memory_space<vmem>>, vector<16x32xbf16>,
    } else {
    }
    return
  }
  func.func @transform_0(%arg0: i32, %arg1: i32, %arg2: i32) -> (i32, i32) {
    %c0_i32 = arith.constant 0 : i32
    return %arg0, %arg2 : i32, i32
  }
  func.func @transform_1(%arg0: i32, %arg1: i32, %arg2: i32) -> (i32, i32) {
    %c0_i32 = arith.constant 0 : i32
    return %arg0, %arg2 : i32, i32
  }
  func.func @transform_2(%arg0: i32, %arg1: i32, %arg2: i32) -> (i32, i32) {
    %c0_i32 = arith.constant 0 : i32
    return %arg0, %arg2 : i32, i32
  }
  func.func @transform_3(%arg0: i32, %arg1: i32, %arg2: i32) -> (i32, i32) {
    %c0_i32 = arith.constant 0 : i32
    return %arg2, %arg1 : i32, i32
  }
  func.func @transform_4(%arg0: i32, %arg1: i32, %arg2: i32) -> (i32, i32) {
    %c0_i32 = arith.constant 0 : i32
    return %arg2, %arg1 : i32, i32
  }
  func.func @transform_5(%arg0: i32, %arg1: i32, %arg2: i32) -> (i32, i32) {
    %c0_i32 = arith.constant 0 : i32
    return %arg2, %arg1 : i32, i32
  }
  func.func @transform_6(%arg0: i32, %arg1: i32, %arg2: i32) -> (i32, i32) {
    %c0_i32 = arith.constant 0 : i32
    %c0_i32_0 = arith.constant 0 : i32
    return %c0_i32, %arg1 : i32, i32
  }
  func.func @transform_7(%arg0: i32, %arg1: i32, %arg2: i32) -> (i32, i32) {
    %c0_i32 = arith.constant 0 : i32
    %c0_i32_0 = arith.constant 0 : i32
    return %c0_i32, %arg1 : i32, i32
  }
  func.func @transform_8(%arg0: i32, %arg1: i32, %arg2: i32) -> (i32, i32) {
    %c0_i32 = arith.constant 0 : i32
    %c0_i32_0 = arith.constant 0 : i32
    return %c0_i32, %arg1 : i32, i32
  }
  func.func @transform_9(%arg0: i32, %arg1: i32, %arg2: i32) -> (i32, i32) {
    %c0_i32 = arith.constant 0 : i32
    return %arg0, %arg1 : i32, i32
  }
  func.func @transform_10(%arg0: i32, %arg1: i32, %arg2: i32) -> (i32, i32) {
    %c0_i32 = arith.constant 0 : i32
    return %arg0, %arg1 : i32, i32
  }
  func.func @transform_11(%arg0: i32, %arg1: i32, %arg2: i32) -> (i32, i32) {
    %c0_i32 = arith.constant 0 : i32
    return %arg0, %arg1 : i32, i32
  }
}

</mosaic_0001>

<llo_original>
// kernel: tpu_custom_call.1
$region0: #{tpu_custom_call.1}
  #allocation0 [shape = 'u32[]', space=smem, size = 0x4, offset = 0x4, fixed_abs, tag = 'smem constant byte address 0x4 - core index']
  #allocation1 [shape = 'u32[144,128]{1,0:T(1,128)}', space=vmem, size = 0x12000, scoped, tag = 'internal scratch']
  #allocation2 [shape = 'f32[16,32]{1,0:T(8,128)}', space=vmem, size = 0x2000, scoped, tag = 'scratch operand']
  #allocation3 [shape = 'f32[16,32]{1,0:T(8,128)}', space=vmem, size = 0x2000, scoped, tag = 'scratch operand']
  #allocation4 [shape = 'f32[16,32]{1,0:T(8,128)}', space=vmem, size = 0x2000, scoped, tag = 'scratch operand']
  %s0 = inlined_call_operand.hbm [shape: bf16[16,32], index: 0, kind: input, shape index: {}]
  %s1 = inlined_call_operand.hbm [shape: bf16[16,32], index: 1, kind: input, shape index: {}]
  %s2 = inlined_call_operand.hbm [shape: bf16[16,32], index: 2, kind: input, shape index: {}]
  %s3 = inlined_call_operand.hbm [shape: bf16[32,32], index: 3, kind: input, shape index: {}]
  %s4 = inlined_call_operand.hbm [shape: bf16[32,32], index: 4, kind: input, shape index: {}]
  %s5 = inlined_call_operand.vmem [shape: bf16[32,32], index: 5, kind: input, shape index: {}]
  %s6 = inlined_call_operand.vmem [shape: f32[1,32], index: 6, kind: input, shape index: {}]
  %s7 = inlined_call_operand.vmem [shape: f32[1,32], index: 7, kind: input, shape index: {}]
  %s8 = inlined_call_operand.vmem [shape: f32[1,32], index: 8, kind: input, shape index: {}]
  %s9 = inlined_call_operand.hbm [shape: bf16[16,32], index: 9, kind: output, shape index: {0}]
  %s10 = inlined_call_operand.hbm [shape: bf16[16,32], index: 10, kind: output, shape index: {1}]
  %s11 = inlined_call_operand.hbm [shape: bf16[16,32], index: 11, kind: output, shape index: {2}]
  %12 = xla_tuple %s9, %s10, %s11
  %s13 = sld [smem:[#allocation0]]
  $region90: #{tpu_custom_call.1} parent=0
    _
  %s15 = ssub.s32 1, %s13
  %s16 = scalar_select 0, %s15, %s13
  $region1: #{tpu_custom_call.1} parent=0
    #allocation5 [shape = 'u8[4096]{0}', space=vmem, size = 0x1000, scoped, tag = 'input window, operand 0, single buffered']
    #allocation6 [shape = 's32[1]{0}', space=sflag, size = 0x4, scoped, tag = 'scoped memory for tpu_custom_call.1']
    #allocation7 [shape = 's32[1]{0}', space=sflag, size = 0x4, scoped, tag = 'scoped memory for tpu_custom_call.1']
    #allocation8 [shape = 'u8[4096]{0}', space=vmem, size = 0x1000, scoped, tag = 'input window, operand 1, single buffered']
    #allocation9 [shape = 's32[1]{0}', space=sflag, size = 0x4, scoped, tag = 'scoped memory for tpu_custom_call.1']
    #allocation10 [shape = 'u8[4096]{0}', space=vmem, size = 0x1000, scoped, tag = 'input window, operand 2, single buffered']
    #allocation11 [shape = 'u8[8192]{0}', space=vmem, size = 0x2000, scoped, tag = 'input window, operand 3, single buffered']
    #allocation12 [shape = 's32[1]{0}', space=sflag, size = 0x4, scoped, tag = 'scoped memory for tpu_custom_call.1']
    #allocation13 [shape = 'u8[8192]{0}', space=vmem, size = 0x2000, scoped, tag = 'input window, operand 4, single buffered']
    #allocation14 [shape = 'u8[4096]{0}', space=vmem, size = 0x1000, scoped, tag = 'output window, operand 0, single buffered']
    #allocation15 [shape = 'u8[4096]{0}', space=vmem, size = 0x1000, scoped, tag = 'output window, operand 1, single buffered']
    #allocation16 [shape = 's32[1]{0}', space=sflag, size = 0x4, scoped, tag = 'scoped memory for tpu_custom_call.1']
    #allocation17 [shape = 'u8[4096]{0}', space=vmem, size = 0x1000, scoped, tag = 'output window, operand 2, single buffered']
    %17 = vsyncpa [#allocation6], 0
    %18 = vsyncpa [#allocation9], 0
    %19 = vsyncpa [#allocation12], 0
    %20 = vsyncpa [#allocation7], 0
    %21 = vsyncpa [#allocation16], 0
    // Predicated region
    $region2: #{tpu_custom_call.1} parent=1 // pred_check
      _
    $region3: #{tpu_custom_call.1} parent=1 // pred_check_branch
      %23 = sbr.rel (0) target = $region5
    $region4: #{tpu_custom_call.1} parent=1 // pred_region
      %s25 = ssub.s32 128, 128
      %26 = vsyncadd [#allocation6], %s25
      %s27 = sshll.u32 [#allocation5], 4
      %s28 = int_to_ptr.vmem [resolvable:$true] %s27
      %33 = dma.hbm_to_vmem [thread:$0]  %s0, 128, %s28, [#allocation6], 64, 64, 4
    $region5: #{tpu_custom_call.1} parent=1 // pred_fallthru
      _
    // Predicated region
    $region6: #{tpu_custom_call.1} parent=1 // pred_check
      _
    $region7: #{tpu_custom_call.1} parent=1 // pred_check_branch
      %35 = sbr.rel (0) target = $region9
    $region8: #{tpu_custom_call.1} parent=1 // pred_region
      %s37 = ssub.s32 128, 128
      %38 = vsyncadd [#allocation9], %s37
      %s39 = sshll.u32 [#allocation8], 4
      %s40 = int_to_ptr.vmem [resolvable:$true] %s39
      %45 = dma.hbm_to_vmem [thread:$0]  %s1, 128, %s40, [#allocation9], 64, 64, 4
    $region9: #{tpu_custom_call.1} parent=1 // pred_fallthru
      _
    // Predicated region
    $region10: #{tpu_custom_call.1} parent=1 // pred_check
      _
    $region11: #{tpu_custom_call.1} parent=1 // pred_check_branch
      %47 = sbr.rel (0) target = $region13
    $region12: #{tpu_custom_call.1} parent=1 // pred_region
      %s49 = ssub.s32 128, 128
      %50 = vsyncadd [#allocation9], %s49
      %s51 = sshll.u32 [#allocation10], 4
      %s52 = int_to_ptr.vmem [resolvable:$true] %s51
      %57 = dma.hbm_to_vmem [thread:$0]  %s2, 128, %s52, [#allocation9], 64, 64, 4
    $region13: #{tpu_custom_call.1} parent=1 // pred_fallthru
      _
    // Predicated region
    $region14: #{tpu_custom_call.1} parent=1 // pred_check
      _
    $region15: #{tpu_custom_call.1} parent=1 // pred_check_branch
      %59 = sbr.rel (0) target = $region17
    $region16: #{tpu_custom_call.1} parent=1 // pred_region
      %s61 = ssub.s32 256, 256
      %62 = vsyncadd [#allocation12], %s61
      %s63 = sshll.u32 [#allocation11], 4
      %s64 = int_to_ptr.vmem [resolvable:$true] %s63
      %69 = dma.hbm_to_vmem [thread:$0]  %s3, 256, %s64, [#allocation12], 64, 64, 4
    $region17: #{tpu_custom_call.1} parent=1 // pred_fallthru
      _
    // Predicated region
    $region18: #{tpu_custom_call.1} parent=1 // pred_check
      _
    $region19: #{tpu_custom_call.1} parent=1 // pred_check_branch
      %71 = sbr.rel (0) target = $region21
    $region20: #{tpu_custom_call.1} parent=1 // pred_region
      %s73 = ssub.s32 256, 256
      %74 = vsyncadd [#allocation12], %s73
      %s75 = sshll.u32 [#allocation13], 4
      %s76 = int_to_ptr.vmem [resolvable:$true] %s75
      %81 = dma.hbm_to_vmem [thread:$0]  %s4, 256, %s76, [#allocation12], 64, 64, 4
    $region21: #{tpu_custom_call.1} parent=1 // pred_fallthru
      _
    // Predicated region
    $region22: #{tpu_custom_call.1} parent=1 // pred_check
      _
    $region23: #{tpu_custom_call.1} parent=1 // pred_check_branch
      %83 = sbr.rel (0) target = $region25
    $region24: #{tpu_custom_call.1} parent=1 // pred_region
      _
    $region25: #{tpu_custom_call.1} parent=1 // pred_fallthru
      _
    // Predicated region
    $region26: #{tpu_custom_call.1} parent=1 // pred_check
      _
    $region27: #{tpu_custom_call.1} parent=1 // pred_check_branch
      %85 = sbr.rel (0) target = $region29
    $region28: #{tpu_custom_call.1} parent=1 // pred_region
      _
    $region29: #{tpu_custom_call.1} parent=1 // pred_fallthru
      _
    // Predicated region
    $region30: #{tpu_custom_call.1} parent=1 // pred_check
      _
    $region31: #{tpu_custom_call.1} parent=1 // pred_check_branch
      %87 = sbr.rel (0) target = $region33
    $region32: #{tpu_custom_call.1} parent=1 // pred_region
      _
    $region33: #{tpu_custom_call.1} parent=1 // pred_fallthru
      _
    // Predicated region
    $region34: #{tpu_custom_call.1} parent=1 // pred_check
      _
    $region35: #{tpu_custom_call.1} parent=1 // pred_check_branch
      %89 = sbr.rel (0) target = $region37
    $region36: #{tpu_custom_call.1} parent=1 // pred_region
      _
    $region37: #{tpu_custom_call.1} parent=1 // pred_fallthru
      _
    // Predicated region
    $region38: #{tpu_custom_call.1} parent=1 // pred_check
      _
    $region39: #{tpu_custom_call.1} parent=1 // pred_check_branch
      %91 = sbr.rel (0) target = $region41
    $region40: #{tpu_custom_call.1} parent=1 // pred_region
      %92 = dma.done [#allocation6], 128
    $region41: #{tpu_custom_call.1} parent=1 // pred_fallthru
      _
    // Predicated region
    $region42: #{tpu_custom_call.1} parent=1 // pred_check
      _
    $region43: #{tpu_custom_call.1} parent=1 // pred_check_branch
      %94 = sbr.rel (0) target = $region45
    $region44: #{tpu_custom_call.1} parent=1 // pred_region
      %95 = dma.done [#allocation9], 128
    $region45: #{tpu_custom_call.1} parent=1 // pred_fallthru
      _
    // Predicated region
    $region46: #{tpu_custom_call.1} parent=1 // pred_check
      _
    $region47: #{tpu_custom_call.1} parent=1 // pred_check_branch
      %97 = sbr.rel (0) target = $region49
    $region48: #{tpu_custom_call.1} parent=1 // pred_region
      %98 = dma.done [#allocation9], 128
    $region49: #{tpu_custom_call.1} parent=1 // pred_fallthru
      _
    // Predicated region
    $region50: #{tpu_custom_call.1} parent=1 // pred_check
      _
    $region51: #{tpu_custom_call.1} parent=1 // pred_check_branch
      %100 = sbr.rel (0) target = $region53
    $region52: #{tpu_custom_call.1} parent=1 // pred_region
      %101 = dma.done [#allocation12], 256
    $region53: #{tpu_custom_call.1} parent=1 // pred_fallthru
      _
    // Predicated region
    $region54: #{tpu_custom_call.1} parent=1 // pred_check
      _
    $region55: #{tpu_custom_call.1} parent=1 // pred_check_branch
      %103 = sbr.rel (0) target = $region57
    $region56: #{tpu_custom_call.1} parent=1 // pred_region
      %104 = dma.done [#allocation12], 256
    $region57: #{tpu_custom_call.1} parent=1 // pred_fallthru
      _
    %p106 = scmp.eq.s32.totalorder 0, 0
    // Predicated region
    $region58: #{tpu_custom_call.1} parent=1 // pred_check
      %p107 = pneg %p106
    $region59: #{tpu_custom_call.1} parent=1 // pred_check_branch
      %109 = sbr.rel (%p107) target = $region61
    $region60: #{tpu_custom_call.1} parent=1 // pred_region
      %vm110 = vcmask 261120
      %111 = vst.msk [vmem:[#allocation2] sm:$0xff] %vm110, 0.0
      %112 = vst.msk [vmem:[#allocation2 + $0x8] sm:$0xff] %vm110, 0.0
      %113 = vst.msk [vmem:[#allocation3] sm:$0xff] %vm110, 0.0
      %114 = vst.msk [vmem:[#allocation3 + $0x8] sm:$0xff] %vm110, 0.0
      %115 = vst.msk [vmem:[#allocation4] sm:$0xff] %vm110, 0.0
      %116 = vst.msk [vmem:[#allocation4 + $0x8] sm:$0xff] %vm110, 0.0
    $region61: #{tpu_custom_call.1} parent=1 // pred_fallthru
      _
    %v117 = vld [vmem:[#allocation2] sm:$0xff]
    %v118 = vld [vmem:[#allocation2 + $0x8] sm:$0xff]
    %v119 = vld [vmem:[#allocation5] sm:$0xf]
    %v120 = vld [vmem:[#allocation5 + $0x4] sm:$0xf]
    %v121 = vld [vmem:[#allocation11] sm:$0xf]
    %v122 = vld [vmem:[#allocation11 + $0x4] sm:$0xf]
    %v123 = vld [vmem:[#allocation11 + $0x8] sm:$0xf]
    %v124 = vld [vmem:[#allocation11 + $0xc] sm:$0xf]
    %v127 = vunpack.c.l.b16 %v119
    %v128 = vunpack.c.l.b16 %v120
    %v129 = vpack.c.b16 %v128, %v127
    %v134 = vunpack.c.l.b16 %v121
    %v135 = vunpack.c.l.b16 %v122
    %v136 = vunpack.c.l.b16 %v123
    %v137 = vunpack.c.l.b16 %v124
    %v138 = vpack.c.b16 %v135, %v134
    %v139 = vpack.c.b16 %v137, %v136
    %vm142 = vcmask 261120
    %v144 = vsel %vm142, %v129, 0
    %146 = vmatprep.subr.bf16.mxu0 0
    %147 = vmatpush1.bf16.msra.mxu0 %v138
    %148 = vmatprep.subr.bf16.mxu0 0
    %149 = vmatpush1.bf16.msra.mxu0 %v139
    %150 = vmatprep.subr.bf16.mxu0 0
    %151 = vmatpush1.bf16.msra.mxu0 0
    %152 = vmatprep.subr.bf16.mxu0 0
    %153 = vmatpush1.bf16.msra.mxu0 0
    %154 = vmatprep.subr.bf16.mxu0 0
    %155 = vmatpush1.bf16.msra.mxu0 0
    %156 = vmatprep.subr.bf16.mxu0 0
    %157 = vmatpush1.bf16.msra.mxu0 0
    %158 = vmatprep.subr.bf16.mxu0 0
    %159 = vmatpush1.bf16.msra.mxu0 0
    %160 = vmatprep.subr.bf16.mxu0 0
    %161 = vmatpush1.bf16.msra.mxu0 0
    %162 = vmatprep.subr.bf16.mxu0 0
    %163 = vmatpush1.bf16.msra.mxu0 0
    %164 = vmatprep.subr.bf16.mxu0 0
    %165 = vmatpush1.bf16.msra.mxu0 0
    %166 = vmatprep.subr.bf16.mxu0 0
    %167 = vmatpush1.bf16.msra.mxu0 0
    %168 = vmatprep.subr.bf16.mxu0 0
    %169 = vmatpush1.bf16.msra.mxu0 0
    %170 = vmatprep.subr.bf16.mxu0 0
    %171 = vmatpush1.bf16.msra.mxu0 0
    %172 = vmatprep.subr.bf16.mxu0 0
    %173 = vmatpush1.bf16.msra.mxu0 0
    %174 = vmatprep.subr.bf16.mxu0 0
    %175 = vmatpush1.bf16.msra.mxu0 0
    %176 = vmatprep.subr.bf16.mxu0 0
    %177 = vmatpush1.bf16.msra.mxu0 0
    %178 = vmatprep.mubr.bf16.mxu0 0
    %179 = vmatmul.mubr.bf16.gmra.mrb[0].mxu0 %v144
    %v180 = vpop.f32.mrb[0].mxu0
    %v181 = vadd.f32 0.0, %v180
    %v182 = vpop.f32.mrb[0].mxu0
    %v183 = vpop.f32.mrb[0].mxu0
    %v184 = vadd.f32 0.0, %v183
    %v185 = vpop.f32.mrb[0].mxu0
    %186 = vdwg.mxu0
    %v187 = vadd.f32 %v117, %v181
    %v188 = vadd.f32 %v118, %v184
    %189 = vst.msk [vmem:[#allocation2] sm:$0xff] %vm142, %v187
    %190 = vst.msk [vmem:[#allocation2 + $0x8] sm:$0xff] %vm142, %v188
    %v191 = vld [vmem:[#allocation3] sm:$0xff]
    %v192 = vld [vmem:[#allocation3 + $0x8] sm:$0xff]
    %v193 = vld [vmem:[#allocation8] sm:$0xf]
    %v194 = vld [vmem:[#allocation8 + $0x4] sm:$0xf]
    %v195 = vld [vmem:[#allocation13] sm:$0xf]
    %v196 = vld [vmem:[#allocation13 + $0x4] sm:$0xf]
    %v197 = vld [vmem:[#allocation13 + $0x8] sm:$0xf]
    %v198 = vld [vmem:[#allocation13 + $0xc] sm:$0xf]
    %v201 = vunpack.c.l.b16 %v193
    %v202 = vunpack.c.l.b16 %v194
    %v203 = vpack.c.b16 %v202, %v201
    %v208 = vunpack.c.l.b16 %v195
    %v209 = vunpack.c.l.b16 %v196
    %v210 = vunpack.c.l.b16 %v197
    %v211 = vunpack.c.l.b16 %v198
    %v212 = vpack.c.b16 %v209, %v208
    %v213 = vpack.c.b16 %v211, %v210
    %v217 = vsel %vm142, %v203, 0
    %219 = vmatprep.subr.bf16.mxu0 0
    %220 = vmatpush1.bf16.msra.mxu0 %v212
    %221 = vmatprep.subr.bf16.mxu0 0
    %222 = vmatpush1.bf16.msra.mxu0 %v213
    %223 = vmatprep.subr.bf16.mxu0 0
    %224 = vmatpush1.bf16.msra.mxu0 0
    %225 = vmatprep.subr.bf16.mxu0 0
    %226 = vmatpush1.bf16.msra.mxu0 0
    %227 = vmatprep.subr.bf16.mxu0 0
    %228 = vmatpush1.bf16.msra.mxu0 0
    %229 = vmatprep.subr.bf16.mxu0 0
    %230 = vmatpush1.bf16.msra.mxu0 0
    %231 = vmatprep.subr.bf16.mxu0 0
    %232 = vmatpush1.bf16.msra.mxu0 0
    %233 = vmatprep.subr.bf16.mxu0 0
    %234 = vmatpush1.bf16.msra.mxu0 0
    %235 = vmatprep.subr.bf16.mxu0 0
    %236 = vmatpush1.bf16.msra.mxu0 0
    %237 = vmatprep.subr.bf16.mxu0 0
    %238 = vmatpush1.bf16.msra.mxu0 0
    %239 = vmatprep.subr.bf16.mxu0 0
    %240 = vmatpush1.bf16.msra.mxu0 0
    %241 = vmatprep.subr.bf16.mxu0 0
    %242 = vmatpush1.bf16.msra.mxu0 0
    %243 = vmatprep.subr.bf16.mxu0 0
    %244 = vmatpush1.bf16.msra.mxu0 0
    %245 = vmatprep.subr.bf16.mxu0 0
    %246 = vmatpush1.bf16.msra.mxu0 0
    %247 = vmatprep.subr.bf16.mxu0 0
    %248 = vmatpush1.bf16.msra.mxu0 0
    %249 = vmatprep.subr.bf16.mxu0 0
    %250 = vmatpush1.bf16.msra.mxu0 0
    %251 = vmatprep.mubr.bf16.mxu0 0
    %252 = vmatmul.mubr.bf16.gmra.mrb[0].mxu0 %v217
    %v253 = vpop.f32.mrb[0].mxu0
    %v254 = vadd.f32 0.0, %v253
    %v255 = vpop.f32.mrb[0].mxu0
    %v256 = vpop.f32.mrb[0].mxu0
    %v257 = vadd.f32 0.0, %v256
    %v258 = vpop.f32.mrb[0].mxu0
    %259 = vdwg.mxu0
    %v260 = vadd.f32 %v191, %v254
    %v261 = vadd.f32 %v192, %v257
    %262 = vst.msk [vmem:[#allocation3] sm:$0xff] %vm142, %v260
    %263 = vst.msk [vmem:[#allocation3 + $0x8] sm:$0xff] %vm142, %v261
    %v264 = vld [vmem:[#allocation4] sm:$0xff]
    %v265 = vld [vmem:[#allocation4 + $0x8] sm:$0xff]
    %v266 = vld [vmem:[#allocation10] sm:$0xf]
    %v267 = vld [vmem:[#allocation10 + $0x4] sm:$0xf]
    %v268 = vld [vmem:[%s5] sm:$0xf]
    %v269 = vld [vmem:[%s5 + $0x4] sm:$0xf]
    %v270 = vld [vmem:[%s5 + $0x8] sm:$0xf]
    %v271 = vld [vmem:[%s5 + $0xc] sm:$0xf]
    %v274 = vunpack.c.l.b16 %v266
    %v275 = vunpack.c.l.b16 %v267
    %v276 = vpack.c.b16 %v275, %v274
    %v281 = vunpack.c.l.b16 %v268
    %v282 = vunpack.c.l.b16 %v269
    %v283 = vunpack.c.l.b16 %v270
    %v284 = vunpack.c.l.b16 %v271
    %v285 = vpack.c.b16 %v282, %v281
    %v286 = vpack.c.b16 %v284, %v283
    %v290 = vsel %vm142, %v276, 0
    %292 = vmatprep.subr.bf16.mxu0 0
    %293 = vmatpush1.bf16.msra.mxu0 %v285
    %294 = vmatprep.subr.bf16.mxu0 0
    %295 = vmatpush1.bf16.msra.mxu0 %v286
    %296 = vmatprep.subr.bf16.mxu0 0
    %297 = vmatpush1.bf16.msra.mxu0 0
    %298 = vmatprep.subr.bf16.mxu0 0
    %299 = vmatpush1.bf16.msra.mxu0 0
    %300 = vmatprep.subr.bf16.mxu0 0
    %301 = vmatpush1.bf16.msra.mxu0 0
    %302 = vmatprep.subr.bf16.mxu0 0
    %303 = vmatpush1.bf16.msra.mxu0 0
    %304 = vmatprep.subr.bf16.mxu0 0
    %305 = vmatpush1.bf16.msra.mxu0 0
    %306 = vmatprep.subr.bf16.mxu0 0
    %307 = vmatpush1.bf16.msra.mxu0 0
    %308 = vmatprep.subr.bf16.mxu0 0
    %309 = vmatpush1.bf16.msra.mxu0 0
    %310 = vmatprep.subr.bf16.mxu0 0
    %311 = vmatpush1.bf16.msra.mxu0 0
    %312 = vmatprep.subr.bf16.mxu0 0
    %313 = vmatpush1.bf16.msra.mxu0 0
    %314 = vmatprep.subr.bf16.mxu0 0
    %315 = vmatpush1.bf16.msra.mxu0 0
    %316 = vmatprep.subr.bf16.mxu0 0
    %317 = vmatpush1.bf16.msra.mxu0 0
    %318 = vmatprep.subr.bf16.mxu0 0
    %319 = vmatpush1.bf16.msra.mxu0 0
    %320 = vmatprep.subr.bf16.mxu0 0
    %321 = vmatpush1.bf16.msra.mxu0 0
    %322 = vmatprep.subr.bf16.mxu0 0
    %323 = vmatpush1.bf16.msra.mxu0 0
    %324 = vmatprep.mubr.bf16.mxu0 0
    %325 = vmatmul.mubr.bf16.gmra.mrb[0].mxu0 %v290
    %v326 = vpop.f32.mrb[0].mxu0
    %v327 = vadd.f32 0.0, %v326
    %v328 = vpop.f32.mrb[0].mxu0
    %v329 = vpop.f32.mrb[0].mxu0
    %v330 = vadd.f32 0.0, %v329
    %v331 = vpop.f32.mrb[0].mxu0
    %332 = vdwg.mxu0
    %v333 = vadd.f32 %v264, %v327
    %v334 = vadd.f32 %v265, %v330
    %335 = vst.msk [vmem:[#allocation4] sm:$0xff] %vm142, %v333
    %336 = vst.msk [vmem:[#allocation4 + $0x8] sm:$0xff] %vm142, %v334
    // Predicated region
    $region62: #{tpu_custom_call.1} parent=1 // pred_check
      %p337 = pneg %p106
    $region63: #{tpu_custom_call.1} parent=1 // pred_check_branch
      %339 = sbr.rel (%p337) target = $region65
    $region64: #{tpu_custom_call.1} parent=1 // pred_region
      %v340 = vld [vmem:[#allocation2] sm:$0xff]
      %v341 = vld [vmem:[#allocation2 + $0x8] sm:$0xff]
      %v342 = vld [vmem:[%s6] sm:$0x1]
      %v344 = vlaneseq
      %v345 = vshrl.u32 %v344, 7
      %v346 = vsub.s32 0, %v345
      %v347 = vrot.slane %v342, %v346
      %v349 = vadd.f32 %v340, %v347
      %v350 = vadd.f32 %v341, %v347
      %v351 = vpack.c.bf16 %v350, %v349
      %v353 = vunpack.c.l.b16 %v351
      %v354 = vunpack.c.h.b16 %v351
      %v355 = vpack.c.b16 %v353, %v353
      %v356 = vpack.c.b16 %v354, %v354
      %vm359 = vcmask 257024
      %360 = vst.msk [vmem:[#allocation14] sm:$0xf] %vm359, %v355
      %361 = vst.msk [vmem:[#allocation14 + $0x4] sm:$0xf] %vm359, %v356
      %v362 = vld [vmem:[#allocation3] sm:$0xff]
      %v363 = vld [vmem:[#allocation3 + $0x8] sm:$0xff]
      %v364 = vld [vmem:[%s7] sm:$0x1]
      %v366 = vlaneseq
      %v367 = vshrl.u32 %v366, 7
      %v368 = vsub.s32 0, %v367
      %v369 = vrot.slane %v364, %v368
      %v371 = vadd.f32 %v362, %v369
      %v372 = vadd.f32 %v363, %v369
      %v373 = vpack.c.bf16 %v372, %v371
      %v375 = vunpack.c.l.b16 %v373
      %v376 = vunpack.c.h.b16 %v373
      %v377 = vpack.c.b16 %v375, %v375
      %v378 = vpack.c.b16 %v376, %v376
      %381 = vst.msk [vmem:[#allocation15] sm:$0xf] %vm359, %v377
      %382 = vst.msk [vmem:[#allocation15 + $0x4] sm:$0xf] %vm359, %v378
      %v383 = vld [vmem:[#allocation4] sm:$0xff]
      %v384 = vld [vmem:[#allocation4 + $0x8] sm:$0xff]
      %v385 = vld [vmem:[%s8] sm:$0x1]
      %v387 = vlaneseq
      %v388 = vshrl.u32 %v387, 7
      %v389 = vsub.s32 0, %v388
      %v390 = vrot.slane %v385, %v389
      %v392 = vadd.f32 %v383, %v390
      %v393 = vadd.f32 %v384, %v390
      %v394 = vpack.c.bf16 %v393, %v392
      %v396 = vunpack.c.l.b16 %v394
      %v397 = vunpack.c.h.b16 %v394
      %v398 = vpack.c.b16 %v396, %v396
      %v399 = vpack.c.b16 %v397, %v397
      %402 = vst.msk [vmem:[#allocation17] sm:$0xf] %vm359, %v398
      %403 = vst.msk [vmem:[#allocation17 + $0x4] sm:$0xf] %vm359, %v399
    $region65: #{tpu_custom_call.1} parent=1 // pred_fallthru
      _
    // Predicated region
    $region66: #{tpu_custom_call.1} parent=1 // pred_check
      _
    $region67: #{tpu_custom_call.1} parent=1 // pred_check_branch
      %405 = sbr.rel (0) target = $region69
    $region68: #{tpu_custom_call.1} parent=1 // pred_region
      %s407 = ssub.s32 128, 128
      %408 = vsyncadd [#allocation7], %s407
      %s409 = sshll.u32 [#allocation14], 4
      %s410 = int_to_ptr.vmem [resolvable:$true] %s409
      %415 = dma.vmem_to_hbm [thread:$0]  %s410, 128, %s9, [#allocation7], 64, 64, 4
    $region69: #{tpu_custom_call.1} parent=1 // pred_fallthru
      _
    // Predicated region
    $region70: #{tpu_custom_call.1} parent=1 // pred_check
      _
    $region71: #{tpu_custom_call.1} parent=1 // pred_check_branch
      %417 = sbr.rel (0) target = $region73
    $region72: #{tpu_custom_call.1} parent=1 // pred_region
      %s419 = ssub.s32 128, 128
      %420 = vsyncadd [#allocation16], %s419
      %s421 = sshll.u32 [#allocation15], 4
      %s422 = int_to_ptr.vmem [resolvable:$true] %s421
      %427 = dma.vmem_to_hbm [thread:$0]  %s422, 128, %s10, [#allocation16], 64, 64, 4
    $region73: #{tpu_custom_call.1} parent=1 // pred_fallthru
      _
    // Predicated region
    $region74: #{tpu_custom_call.1} parent=1 // pred_check
      _
    $region75: #{tpu_custom_call.1} parent=1 // pred_check_branch
      %429 = sbr.rel (0) target = $region77
    $region76: #{tpu_custom_call.1} parent=1 // pred_region
      %s431 = ssub.s32 128, 128
      %432 = vsyncadd [#allocation16], %s431
      %s433 = sshll.u32 [#allocation17], 4
      %s434 = int_to_ptr.vmem [resolvable:$true] %s433
      %439 = dma.vmem_to_hbm [thread:$0]  %s434, 128, %s11, [#allocation16], 64, 64, 4
    $region77: #{tpu_custom_call.1} parent=1 // pred_fallthru
      _
    // Predicated region
    $region78: #{tpu_custom_call.1} parent=1 // pred_check
      _
    $region79: #{tpu_custom_call.1} parent=1 // pred_check_branch
      %441 = sbr.rel (0) target = $region81
    $region80: #{tpu_custom_call.1} parent=1 // pred_region
      %442 = dma.done [#allocation7], 128
    $region81: #{tpu_custom_call.1} parent=1 // pred_fallthru
      _
    // Predicated region
    $region82: #{tpu_custom_call.1} parent=1 // pred_check
      _
    $region83: #{tpu_custom_call.1} parent=1 // pred_check_branch
      %444 = sbr.rel (0) target = $region85
    $region84: #{tpu_custom_call.1} parent=1 // pred_region
      %445 = dma.done [#allocation16], 128
    $region85: #{tpu_custom_call.1} parent=1 // pred_fallthru
      _
    // Predicated region
    $region86: #{tpu_custom_call.1} parent=1 // pred_check
      _
    $region87: #{tpu_custom_call.1} parent=1 // pred_check_branch
      %447 = sbr.rel (0) target = $region89
    $region88: #{tpu_custom_call.1} parent=1 // pred_region
      %448 = dma.done [#allocation16], 128
    $region89: #{tpu_custom_call.1} parent=1 // pred_fallthru
      _
    %449 = vsyncpa [#allocation6], 1
    %450 = vsyncpa [#allocation9], 1
    %451 = vsyncpa [#allocation12], 1
    %452 = vsyncpa [#allocation7], 1
    %453 = vsyncpa [#allocation16], 1

</llo_original>
